<compile_context>
chip_gen: v7x
topology: tpu7x:2x2x1
jax: 0.10.0
libtpu: 0.0.40
codegen_flags: <defaults>
</compile_context>

<pallas_src>
import functools
import math

import jax
import jax.numpy as jnp
from jax import lax
from jax.experimental import pallas as pl
from jax.experimental.pallas import tpu as pltpu

_LANE = 128
_SUBLANE = 8
_MAX_TILE_R = 8192    # 8192 x 128 x 4 B = 4 MiB per f32 input tile
_CHUNK_R = 1024       # in-kernel compute chunk: 0.5 MiB f32 temporaries


def _round_up(a: int, b: int) -> int:
    return (a + b - 1) // b * b


def _cdiv(a: int, b: int) -> int:
    return -(-a // b)


def _bce_partial_kernel(x_ref, t_ref, o_ref, *, rows, tile_r, chunk_r):
    """One grid step: (tile_r, 128) tile -> (8, 128) partial sums."""
    tile_row0 = pl.program_id(0) * tile_r
    n_chunks = tile_r // chunk_r  # static

    def chunk_body(c, acc):
        r = pl.multiple_of(c * chunk_r, chunk_r)
        x = x_ref[pl.ds(r, chunk_r), :].astype(jnp.float32)
        t = t_ref[pl.ds(r, chunk_r), :].astype(jnp.float32)

        # BCE with PyTorch's -100 clamp on the log terms, strength-reduced:
        #   -(t*log(x) + (1-t)*log(1-x)) == -(t*(log_x - log_1mx) + log_1mx)
        log_x = jnp.maximum(jnp.log(x), -100.0)
        log_1mx = jnp.maximum(jnp.log(1.0 - x), -100.0)
        bce = -(t * (log_x - log_1mx) + log_1mx)

        # Mask rows past the true (static) row count: the last grid tile may
        # read Pallas-padded out-of-bounds rows; jnp.where stops any NaN from
        # that unspecified data from propagating.
        row_ids = tile_row0 + r + lax.broadcasted_iota(
            jnp.int32, (chunk_r, _LANE), 0)
        bce = jnp.where(row_ids < rows, bce, 0.0)

        # Fold sublane groups: (chunk_r, 128) -> (chunk_r//8, 8, 128) -> (8, 128).
        part = jnp.sum(bce.reshape(chunk_r // _SUBLANE, _SUBLANE, _LANE), axis=0)
        return acc + part

    acc0 = jnp.zeros((_SUBLANE, _LANE), jnp.float32)
    # Full-vreg, unmasked (8,128) store of this tile's partial sums.
    o_ref[...] = lax.fori_loop(0, n_chunks, chunk_body, acc0)


def bce_loss_pallas(input_scale: jax.Array, target_scale: jax.Array) -> jax.Array:
    """Sum over dim 0 of per-slice mean BCE. Inputs: (B, ...) with values in (0,1).

    Accepts f32 or bf16 inputs; all math is done in f32 inside the kernel.
    """
    assert input_scale.shape == target_scale.shape
    B = input_scale.shape[0]
    n_slice = math.prod(input_scale.shape[1:])   # elements per batch slice
    n_total = B * n_slice

    # ---- lane-dense (rows, 128) view; free reshape in the common case ------
    x = input_scale.reshape(n_total)             # contiguous reshape: no copy
    t = target_scale.reshape(n_total)
    rem = n_total % _LANE
    if rem:
        # Rare unaligned case: pad by < 128 elements with (x=1, t=1), whose
        # BCE is exactly 0 under the clamped formula. (Aligned case: no copy.)
        pad = _LANE - rem
        x = jnp.pad(x, (0, pad), constant_values=1.0)
        t = jnp.pad(t, (0, pad), constant_values=1.0)
        n_view = n_total + pad
    else:
        n_view = n_total
    rows = n_view // _LANE
    x = x.reshape(rows, _LANE)
    t = t.reshape(rows, _LANE)

    # ---- tile selection: big tiles, but >= 4 tiles when possible (megacore) -
    target_min_tiles = 4
    tile_r = min(_MAX_TILE_R,
                 max(_SUBLANE, _round_up(_cdiv(rows, target_min_tiles), _SUBLANE)))
    if tile_r > _CHUNK_R:
        tile_r = _round_up(tile_r, _CHUNK_R)     # whole number of compute chunks
        chunk_r = _CHUNK_R
    else:
        chunk_r = tile_r
    num_tiles = _cdiv(rows, tile_r)              # last tile may be short (masked)

    itemsize = jnp.dtype(input_scale.dtype).itemsize
    cost = pl.CostEstimate(
        flops=8 * n_total,
        transcendentals=2 * n_total,
        bytes_accessed=2 * n_total * itemsize + num_tiles * _SUBLANE * _LANE * 4,
    )

    kernel = functools.partial(
        _bce_partial_kernel, rows=rows, tile_r=tile_r, chunk_r=chunk_r)

    partials = pl.pallas_call(
        kernel,
        out_shape=jax.ShapeDtypeStruct((num_tiles, _SUBLANE, _LANE), jnp.float32),
        grid_spec=pltpu.PrefetchScalarGridSpec(
            num_scalar_prefetch=0,
            grid=(num_tiles,),
            in_specs=[
                pl.BlockSpec((tile_r, _LANE), lambda i: (i, 0)),
                pl.BlockSpec((tile_r, _LANE), lambda i: (i, 0)),
            ],
            # Squeezed leading dim: kernel sees an (8, 128) output ref.
            out_specs=pl.BlockSpec((None, _SUBLANE, _LANE), lambda i: (i, 0, 0)),
        ),
        compiler_params=pltpu.CompilerParams(
            # Each grid step writes its own output block -> fully parallel
            # (shards across both TensorCores on v7x; no-op on v5e/v6e).
            dimension_semantics=("parallel",),
            # 2 inputs x 2 buffers x <=4 MiB tiles + ~3 MiB chunk temporaries
            # ~= 20 MiB; 48 MiB cap fits v7x's 64 MiB and v5e/v6e's 128 MiB.
            vmem_limit_bytes=48 * 1024 * 1024,
        ),
        cost_estimate=cost,
    )(x, t)

    # Sum of all per-element BCE terms, then one scale by 1/N_slice
    # (== sum over batch of per-slice means, since all slices share N_slice).
    return jnp.sum(partials) * (1.0 / float(n_slice))


def bce_loss_ref(input_scale: jax.Array, target_scale: jax.Array) -> jax.Array:
    """Pure-JAX reference mirroring the PyTorch module (per-slice mean, then sum)."""
    x = input_scale.astype(jnp.float32)
    t = target_scale.astype(jnp.float32)
    log_x = jnp.maximum(jnp.log(x), -100.0)
    log_1mx = jnp.maximum(jnp.log(1.0 - x), -100.0)
    bce = -(t * log_x + (1.0 - t) * log_1mx)
    per_slice = jnp.mean(bce.reshape(bce.shape[0], -1), axis=1)
    return jnp.sum(per_slice)


if __name__ == "__main__":
    key = jax.random.PRNGKey(0)
    k1, k2 = jax.random.split(key)

    B, C, H, W = 2, 4, 16, 16
    # BCE requires inputs in (0,1); targets in [0,1].
    logits = jax.random.normal(k1, (B, C, H, W), dtype=jnp.float32)
    input_scale = jax.nn.sigmoid(logits)
    target_scale = jax.random.uniform(k2, (B, C, H, W), dtype=jnp.float32)

    loss = bce_loss_pallas(input_scale, target_scale)
    jax.block_until_ready(loss)

    ref = bce_loss_ref(input_scale, target_scale)
    assert jnp.allclose(loss, ref, rtol=1e-5, atol=1e-5), (loss, ref)

    print("KERNEL_OK")
</pallas_src>

<mosaic_0001>
module attributes {stable_mosaic.version = 11 : i64} {
  func.func @_bce_partial_kernel(%arg0: i32, %arg1: memref<8x128xf32, #tpu.memory_space<vmem>>, %arg2: memref<8x128xf32, #tpu.memory_space<vmem>>, %arg3: memref<1x8x128xf32, #tpu.memory_space<vmem>>) attributes {dimension_semantics = [#tpu.dimension_semantics<parallel>], iteration_bounds = array<i64: 2>, scalar_prefetch = 0 : i64, scratch_operands = 0 : i64, tpu.core_type = #tpu.core_type<tc>, window_params = [{transform_indices = @transform_0, window_bounds = array<i64: 8, 128>}, {transform_indices = @transform_1, window_bounds = array<i64: 8, 128>}, {transform_indices = @transform_2, window_bounds = array<i64: 1, 8, 128>}]} {
    %c8_i32 = arith.constant 8 : i32
    %0 = arith.muli %arg0, %c8_i32 : i32
    %cst = arith.constant 0.000000e+00 : f32
    %1 = vector.broadcast %cst : f32 to vector<8x128xf32>
    %c0_i32 = arith.constant 0 : i32
    %c8_i32_0 = arith.constant 8 : i32
    %2 = arith.muli %c0_i32, %c8_i32_0 : i32
    %3 = tpu.assume_multiple %2, 8 : i32
    %4 = arith.index_cast %3 : i32 to index
    %c0 = arith.constant 0 : index
    %5 = vector.load %arg1[%4, %c0] : memref<8x128xf32, #tpu.memory_space<vmem>>, vector<8x128xf32>
    %6 = arith.index_cast %3 : i32 to index
    %c0_1 = arith.constant 0 : index
    %7 = vector.load %arg2[%6, %c0_1] : memref<8x128xf32, #tpu.memory_space<vmem>>, vector<8x128xf32>
    %8 = math.log %5 : vector<8x128xf32>
    %cst_2 = arith.constant -1.000000e+02 : f32
    %9 = vector.broadcast %cst_2 : f32 to vector<8x128xf32>
    %10 = arith.maximumf %8, %9 : vector<8x128xf32>
    %cst_3 = arith.constant 1.000000e+00 : f32
    %11 = vector.broadcast %cst_3 : f32 to vector<8x128xf32>
    %12 = arith.subf %11, %5 : vector<8x128xf32>
    %13 = math.log %12 : vector<8x128xf32>
    %cst_4 = arith.constant -1.000000e+02 : f32
    %14 = vector.broadcast %cst_4 : f32 to vector<8x128xf32>
    %15 = arith.maximumf %13, %14 : vector<8x128xf32>
    %16 = arith.subf %10, %15 : vector<8x128xf32>
    %17 = arith.mulf %7, %16 : vector<8x128xf32>
    %18 = arith.addf %17, %15 : vector<8x128xf32>
    %cst_5 = arith.constant 0.000000e+00 : f32
    %19 = vector.broadcast %cst_5 : f32 to vector<8x128xf32>
    %20 = arith.subf %19, %18 : vector<8x128xf32>
    %21 = arith.addi %0, %3 : i32
    %22 = tpu.iota {dimensions = array<i32: 0>} : vector<8x128xi32>
    %23 = vector.broadcast %21 : i32 to vector<8x128xi32>
    %24 = arith.addi %23, %22 : vector<8x128xi32>
    %c16_i32 = arith.constant 16 : i32
    %25 = vector.broadcast %c16_i32 : i32 to vector<8x128xi32>
    %26 = arith.cmpi slt, %24, %25 : vector<8x128xi32>
    %cst_6 = arith.constant 0.000000e+00 : f32
    %27 = vector.broadcast %cst_6 : f32 to vector<8x128xf32>
    %28 = arith.select %26, %20, %27 : vector<8x128xi1>, vector<8x128xf32>
    %29 = vector.shape_cast %28 : vector<8x128xf32> to vector<1x8x128xf32>
    %cst_7 = arith.constant dense<0.000000e+00> : vector<8x128xf32>
    %30 = vector.multi_reduction <add>, %29, %cst_7 [0] : vector<1x8x128xf32> to vector<8x128xf32>
    %31 = arith.addf %1, %30 : vector<8x128xf32>
    %c1_i32 = arith.constant 1 : i32
    %c0_8 = arith.constant 0 : index
    %c0_9 = arith.constant 0 : index
    %c0_10 = arith.constant 0 : index
    %32 = vector.load %arg3[%c0_8, %c0_9, %c0_10] : memref<1x8x128xf32, #tpu.memory_space<vmem>>, vector<1x8x128xf32>
    %33 = vector.shape_cast %32 : vector<1x8x128xf32> to vector<8x128xf32>
    %34 = vector.shape_cast %31 : vector<8x128xf32> to vector<1x8x128xf32>
    tpu.vector_store %arg3[%c0_8, %c0_9, %c0_10], %34 {strides = array<i32>} : memref<1x8x128xf32, #tpu.memory_space<vmem>>, vector<1x8x128xf32>,
    return
  }
  func.func @transform_0(%arg0: i32) -> (i32, i32) {
    %c0_i32 = arith.constant 0 : i32
    %c0_i32_0 = arith.constant 0 : i32
    return %arg0, %c0_i32 : i32, i32
  }
  func.func @transform_1(%arg0: i32) -> (i32, i32) {
    %c0_i32 = arith.constant 0 : i32
    %c0_i32_0 = arith.constant 0 : i32
    return %arg0, %c0_i32 : i32, i32
  }
  func.func @transform_2(%arg0: i32) -> (i32, i32, i32) {
    %c0_i32 = arith.constant 0 : i32
    %c0_i32_0 = arith.constant 0 : i32
    %c0_i32_1 = arith.constant 0 : i32
    return %arg0, %c0_i32, %c0_i32_0 : i32, i32, i32
  }
}

</mosaic_0001>

<llo_original>
// kernel: tpu_custom_call.1
$region0: #{tpu_custom_call.1}
  #allocation0 [shape = 'u32[]', space=smem, size = 0x4, offset = 0x4, fixed_abs, tag = 'smem constant byte address 0x4 - core index']
  #allocation1 [shape = 'u32[144,128]{1,0:T(1,128)}', space=vmem, size = 0x12000, scoped, tag = 'internal scratch']
  %s0 = inlined_call_operand.hbm [shape: f32[16,128], index: 0, kind: input, shape index: {}]
  %s1 = inlined_call_operand.hbm [shape: f32[16,128], index: 1, kind: input, shape index: {}]
  %s2 = inlined_call_operand.hbm [shape: f32[2,8,128], index: 2, kind: output, shape index: {}]
  %s3 = sld [smem:[#allocation0]]
  $region49: #{tpu_custom_call.1} parent=0
    _
  %s5 = ssub.s32 1, %s3
  %s6 = scalar_select 0, %s5, %s3
  $region1: #{tpu_custom_call.1} parent=0
    #allocation2 [shape = 'u8[8192]{0}', space=vmem, size = 0x2000, scoped, tag = 'input window, operand 0']
    #allocation3 [shape = 's32[2]{0}', space=sflag, size = 0x8, scoped, tag = 'scoped memory for tpu_custom_call.1']
    #allocation4 [shape = 's32[2]{0}', space=sflag, size = 0x8, scoped, tag = 'scoped memory for tpu_custom_call.1']
    #allocation5 [shape = 'u8[8192]{0}', space=vmem, size = 0x2000, scoped, tag = 'input window, operand 1']
    #allocation6 [shape = 's32[2]{0}', space=sflag, size = 0x8, scoped, tag = 'scoped memory for tpu_custom_call.1']
    #allocation7 [shape = 'u8[8192]{0}', space=vmem, size = 0x2000, scoped, tag = 'output window, operand 0']
    %7 = vsyncpa [#allocation3], 0
    %s8 = scalar_lea.sflag [#allocation3], 1
    %9 = vsyncpa %s8, 0
    %10 = vsyncpa [#allocation6], 0
    %s11 = scalar_lea.sflag [#allocation6], 1
    %12 = vsyncpa %s11, 0
    %13 = vsyncpa [#allocation4], 0
    %s14 = scalar_lea.sflag [#allocation4], 1
    %15 = vsyncpa %s14, 0
    loop: start=0, step=1, limit=4
    $region2: #{tpu_custom_call.1} parent=1 // loop_pre_header
      _
    $region3: #{tpu_custom_call.1} parent=1 // loop_header
      %s17 = sphi 0, %s21
      %p18 = scmp.ge.s32.totalorder %s17, 4
      %s27 = sphi 0, %s29
      %s30 = sphi 0, %s27
      %s31 = sphi 0, %s30
      %s47 = sphi 0, %s31
      %s53 = sphi 0, %s55
      %s56 = sphi 0, %s53
      %s57 = sphi 0, %s56
      %s73 = sphi 0, %s57
      %s79 = sphi 0, %s81
      %s82 = sphi 0, %s79
      %s83 = sphi 0, %s82
      %s99 = sphi 0, %s83
    $region4: #{tpu_custom_call.1} parent=1 // loop_header_branch
      %20 = sbr.rel (%p18) target = $region8
    $region5: #{tpu_custom_call.1} parent=1 // loop_body
      %s22 = ssub.s32 %s17, 1
      %s23 = ssub.s32 %s17, 2
      %s24 = sadd.s32 %s17, 1
      %s25 = ssub.s32 %s17, %s24
      %p26 = scmp.eq.s32.totalorder %s25, 0
      %s28 = sadd.s32 %s27, 1
      %s29 = scalar_select %p26, %s27, %s28
      %p32 = pneg %p26
      %p33 = scmp.eq.s32.totalorder %s17, 1
      %p34 = por %p32, %p33
      %p35 = scmp.ne.s32.totalorder %s27, %s30
      %p36 = scmp.eq.s32.totalorder %s17, 0
      %p37 = por %p35, %p36
      %p38 = scmp.ne.s32.totalorder %s27, %s30
      %p39 = scmp.eq.s32.totalorder %s22, 1
      %p40 = por %p38, %p39
      %p41 = scmp.ne.s32.totalorder %s30, %s31
      %p42 = scmp.eq.s32.totalorder %s22, 0
      %p43 = por %p41, %p42
      %p44 = scmp.ne.s32.totalorder %s30, %s31
      %p45 = scmp.eq.s32.totalorder %s23, 1
      %p46 = por %p44, %p45
      %p48 = scmp.ne.s32.totalorder %s31, %s47
      %p49 = scmp.eq.s32.totalorder %s23, 0
      %p50 = por %p48, %p49
      %s51 = ssub.s32 %s17, %s24
      %p52 = scmp.eq.s32.totalorder %s51, 0
      %s54 = sadd.s32 %s53, 1
      %s55 = scalar_select %p52, %s53, %s54
      %p58 = pneg %p52
      %p59 = scmp.eq.s32.totalorder %s17, 1
      %p60 = por %p58, %p59
      %p61 = scmp.ne.s32.totalorder %s53, %s56
      %p62 = scmp.eq.s32.totalorder %s17, 0
      %p63 = por %p61, %p62
      %p64 = scmp.ne.s32.totalorder %s53, %s56
      %p65 = scmp.eq.s32.totalorder %s22, 1
      %p66 = por %p64, %p65
      %p67 = scmp.ne.s32.totalorder %s56, %s57
      %p68 = scmp.eq.s32.totalorder %s22, 0
      %p69 = por %p67, %p68
      %p70 = scmp.ne.s32.totalorder %s56, %s57
      %p71 = scmp.eq.s32.totalorder %s23, 1
      %p72 = por %p70, %p71
      %p74 = scmp.ne.s32.totalorder %s57, %s73
      %p75 = scmp.eq.s32.totalorder %s23, 0
      %p76 = por %p74, %p75
      %s77 = ssub.s32 %s17, %s24
      %p78 = scmp.eq.s32.totalorder %s77, 0
      %s80 = sadd.s32 %s79, 1
      %s81 = scalar_select %p78, %s79, %s80
      %p84 = pneg %p78
      %p85 = scmp.eq.s32.totalorder %s17, 1
      %p86 = por %p84, %p85
      %p87 = scmp.ne.s32.totalorder %s79, %s82
      %p88 = scmp.eq.s32.totalorder %s17, 0
      %p89 = por %p87, %p88
      %p90 = scmp.ne.s32.totalorder %s79, %s82
      %p91 = scmp.eq.s32.totalorder %s22, 1
      %p92 = por %p90, %p91
      %p93 = scmp.ne.s32.totalorder %s82, %s83
      %p94 = scmp.eq.s32.totalorder %s22, 0
      %p95 = por %p93, %p94
      %p96 = scmp.ne.s32.totalorder %s82, %s83
      %p97 = scmp.eq.s32.totalorder %s23, 1
      %p98 = por %p96, %p97
      %p100 = scmp.ne.s32.totalorder %s83, %s99
      %p101 = scmp.eq.s32.totalorder %s23, 0
      %p102 = por %p100, %p101
      %p103 = scmp.le.s32.totalorder 1, %s17
      %p104 = scmp.lt.s32.totalorder %s17, 3
      %p105 = pnand %p103, %p104
      %p106 = pneg %p105
      // Predicated region
      $region9: #{tpu_custom_call.1} parent=5 // pred_check
        _
      $region10: #{tpu_custom_call.1} parent=5 // pred_check_branch
        %108 = sbr.rel (%p105) target = $region12
      $region11: #{tpu_custom_call.1} parent=5 // pred_region
        %s109 = ssub.s32 %s17, 1
      $region12: #{tpu_custom_call.1} parent=5 // pred_fallthru
        _
      %p110 = scmp.lt.s32.totalorder %s17, 2
      // Predicated region
      $region13: #{tpu_custom_call.1} parent=5 // pred_check
        %p111 = pneg %p110
      $region14: #{tpu_custom_call.1} parent=5 // pred_check_branch
        %113 = sbr.rel (%p111) target = $region16
      $region15: #{tpu_custom_call.1} parent=5 // pred_region
        // Predicated region
        $region17: #{tpu_custom_call.1} parent=15 // pred_check
          %p114 = pneg %p37
        $region18: #{tpu_custom_call.1} parent=15 // pred_check_branch
          %116 = sbr.rel (%p114) target = $region20
        $region19: #{tpu_custom_call.1} parent=15 // pred_region
          %s117 = sand.u32 %s27, 1
          %s118 = scalar_lea.sflag [#allocation3], %s117
          %s119 = sand.u32 %s27, 1
          %s120 = smul.addr %s119, 8
          %s121 = scalar_lea.vmem [#allocation2], %s120
          %s123 = ssub.s32 128, 128
          %124 = vsyncadd %s118, %s123
          %s125 = smul.addr %s17, 128
          %s126 = scalar_lea.hbm %s0, %s125
          %s128 = sshll.u32 %s121, 4
          %s129 = int_to_ptr.vmem [resolvable:$true] %s128
          %131 = dma.hbm_to_vmem [thread:$0]  %s126, 128, %s129, %s118
        $region20: #{tpu_custom_call.1} parent=15 // pred_fallthru
          _
        // Predicated region
        $region21: #{tpu_custom_call.1} parent=15 // pred_check
          %p132 = pneg %p63
        $region22: #{tpu_custom_call.1} parent=15 // pred_check_branch
          %134 = sbr.rel (%p132) target = $region24
        $region23: #{tpu_custom_call.1} parent=15 // pred_region
          %s135 = sand.u32 %s53, 1
          %s136 = scalar_lea.sflag [#allocation6], %s135
          %s137 = sand.u32 %s53, 1
          %s138 = smul.addr %s137, 8
          %s139 = scalar_lea.vmem [#allocation5], %s138
          %s141 = ssub.s32 128, 128
          %142 = vsyncadd %s136, %s141
          %s143 = smul.addr %s17, 128
          %s144 = scalar_lea.hbm %s1, %s143
          %s146 = sshll.u32 %s139, 4
          %s147 = int_to_ptr.vmem [resolvable:$true] %s146
          %149 = dma.hbm_to_vmem [thread:$0]  %s144, 128, %s147, %s136
        $region24: #{tpu_custom_call.1} parent=15 // pred_fallthru
          _
      $region16: #{tpu_custom_call.1} parent=5 // pred_fallthru
        _
      %p150 = scmp.le.s32.totalorder 1, %s17
      %p151 = scmp.lt.s32.totalorder %s17, 3
      %p152 = pnand %p150, %p151
      %p153 = pneg %p152
      // Predicated region
      $region25: #{tpu_custom_call.1} parent=5 // pred_check
        _
      $region26: #{tpu_custom_call.1} parent=5 // pred_check_branch
        %155 = sbr.rel (%p152) target = $region28
      $region27: #{tpu_custom_call.1} parent=5 // pred_region
        %s156 = ssub.s32 %s17, 1
        %s157 = sand.u32 %s30, 1
        %s158 = scalar_lea.sflag [#allocation3], %s157
        %s159 = sand.u32 %s30, 1
        %s160 = smul.addr %s159, 8
        %s161 = scalar_lea.vmem [#allocation2], %s160
        // Predicated region
        $region29: #{tpu_custom_call.1} parent=27 // pred_check
          %p162 = pneg %p43
        $region30: #{tpu_custom_call.1} parent=27 // pred_check_branch
          %164 = sbr.rel (%p162) target = $region32
        $region31: #{tpu_custom_call.1} parent=27 // pred_region
          %165 = dma.done %s158, 128
        $region32: #{tpu_custom_call.1} parent=27 // pred_fallthru
          _
        %s166 = sand.u32 %s56, 1
        %s167 = scalar_lea.sflag [#allocation6], %s166
        %s168 = sand.u32 %s56, 1
        %s169 = smul.addr %s168, 8
        %s170 = scalar_lea.vmem [#allocation5], %s169
        // Predicated region
        $region33: #{tpu_custom_call.1} parent=27 // pred_check
          %p171 = pneg %p69
        $region34: #{tpu_custom_call.1} parent=27 // pred_check_branch
          %173 = sbr.rel (%p171) target = $region36
        $region35: #{tpu_custom_call.1} parent=27 // pred_region
          %174 = dma.done %s167, 128
        $region36: #{tpu_custom_call.1} parent=27 // pred_fallthru
          _
        %s175 = sand.u32 %s30, 1
        %s176 = scalar_lea.sflag [#allocation3], %s175
        %s177 = sand.u32 %s30, 1
        %s178 = smul.addr %s177, 8
        %s179 = scalar_lea.vmem [#allocation2], %s178
        %p180 = pneg %p43
        %p181 = pneg %p40
        %s182 = sand.u32 %s56, 1
        %s183 = scalar_lea.sflag [#allocation6], %s182
        %s184 = sand.u32 %s56, 1
        %s185 = smul.addr %s184, 8
        %s186 = scalar_lea.vmem [#allocation5], %s185
        %p187 = pneg %p69
        %p188 = pneg %p66
        %p189 = pneg %p95
        %p190 = pneg %p92
        %s191 = sand.u32 %s82, 1
        %s192 = scalar_lea.sflag [#allocation4], %s191
        %s193 = sand.u32 %s82, 1
        %s194 = smul.addr %s193, 8
        %s195 = scalar_lea.vmem [#allocation7], %s194
        %s196 = smul.u32 %s22, 8
        %v197 = vld [vmem:[%s161] sm:$0xff]
        %v198 = vld [vmem:[%s170] sm:$0xff]
        %v199 = vlog2.pop %v197
        %v200 = vmul.f32 %v199, 0.6931472
        %v201 = vmax.f32 %v200, -100.0
        %v202 = vsub.f32 1.0, %v197
        %v203 = vlog2.pop %v202
        %v204 = vmul.f32 %v203, 0.6931472
        %v205 = vmax.f32 %v204, -100.0
        %v206 = vsub.f32 %v201, %v205
        %v207 = vmul.f32 %v198, %v206
        %v208 = vadd.f32 %v207, %v205
        %v209 = vsub.f32 0.0, %v208
        %s210 = sadd.s32 %s196, 0
        %v211 = vlaneseq
        %v212 = vshrl.u32 %v211, 7
        %v213 = vstv %s210
        %v214 = vadd.s32 %v213, %v212
        %vm215 = vcmp.lt.s32.totalorder %v214, 16
        %v216 = vsel %vm215, %v209, 0.0
        %v217 = vadd.f32 %v216, 0.0
        %v218 = vadd.f32 %v217, 0.0
        %219 = vst [vmem:[%s195] sm:$0xff] %v218
        %s220 = sand.u32 %s82, 1
        %s221 = scalar_lea.sflag [#allocation4], %s220
        %s222 = sand.u32 %s82, 1
        %s223 = smul.addr %s222, 8
        %s224 = scalar_lea.vmem [#allocation7], %s223
        // Predicated region
        $region37: #{tpu_custom_call.1} parent=27 // pred_check
          %p225 = pneg %p92
        $region38: #{tpu_custom_call.1} parent=27 // pred_check_branch
          %227 = sbr.rel (%p225) target = $region40
        $region39: #{tpu_custom_call.1} parent=27 // pred_region
          %s229 = ssub.s32 128, 128
          %230 = vsyncadd %s221, %s229
          %s231 = smul.addr %s22, 128
          %s232 = scalar_lea.hbm %s2, %s231
          %s234 = sshll.u32 %s224, 4
          %s235 = int_to_ptr.vmem [resolvable:$true] %s234
          %237 = dma.vmem_to_hbm [thread:$0]  %s235, 128, %s232, %s221
        $region40: #{tpu_custom_call.1} parent=27 // pred_fallthru
          _
      $region28: #{tpu_custom_call.1} parent=5 // pred_fallthru
        _
      %p238 = scmp.le.s32.totalorder 2, %s17
      // Predicated region
      $region41: #{tpu_custom_call.1} parent=5 // pred_check
        %p239 = pneg %p238
      $region42: #{tpu_custom_call.1} parent=5 // pred_check_branch
        %241 = sbr.rel (%p239) target = $region44
      $region43: #{tpu_custom_call.1} parent=5 // pred_region
        %s242 = ssub.s32 %s17, 2
        // Predicated region
        $region45: #{tpu_custom_call.1} parent=43 // pred_check
          %p243 = pneg %p98
        $region46: #{tpu_custom_call.1} parent=43 // pred_check_branch
          %245 = sbr.rel (%p243) target = $region48
        $region47: #{tpu_custom_call.1} parent=43 // pred_region
          %s246 = sand.u32 %s83, 1
          %s247 = scalar_lea.sflag [#allocation4], %s246
          %s248 = sand.u32 %s83, 1
          %s249 = smul.addr %s248, 8
          %s250 = scalar_lea.vmem [#allocation7], %s249
          %251 = dma.done %s247, 128
        $region48: #{tpu_custom_call.1} parent=43 // pred_fallthru
          _
      $region44: #{tpu_custom_call.1} parent=5 // pred_fallthru
        _
    $region6: #{tpu_custom_call.1} parent=1 // loop_footer
      %s21 = sadd.s32 1, %s17
    $region7: #{tpu_custom_call.1} parent=1 // loop_footer_branch
      %16 = sbr.rel target = $region3
    $region8: #{tpu_custom_call.1} parent=1 // loop_exit
      _
    %252 = vsyncpa [#allocation3], 1
    %s253 = scalar_lea.sflag [#allocation3], 1
    %254 = vsyncpa %s253, 1
    %255 = vsyncpa [#allocation6], 1
    %s256 = scalar_lea.sflag [#allocation6], 1
    %257 = vsyncpa %s256, 1
    %258 = vsyncpa [#allocation4], 1
    %s259 = scalar_lea.sflag [#allocation4], 1
    %260 = vsyncpa %s259, 1

</llo_original>
